<compile_context>
chip_gen: v6e
topology: v6e:2x2x1
jax: 0.10.0
libtpu: 0.0.40
codegen_flags: <defaults>
</compile_context>

<pallas_src>
import functools

import jax
import jax.numpy as jnp
from jax.experimental import pallas as pl
from jax.experimental.pallas import tpu as pltpu

_MIB = 1024 * 1024


def _chip_info():
    """Best-effort (vmem_capacity_bytes, tensorcore_count) for the local TPU."""
    try:
        kind = jax.devices()[0].device_kind.lower()
    except Exception:
        kind = ""
    is_v7 = ("v7" in kind) or ("7x" in kind)

    vmem = None
    try:
        vmem = getattr(pltpu.get_tpu_info(), "vmem_capacity_bytes", None)
    except Exception:
        vmem = None
    if not vmem:
        if is_v7:
            vmem = 64 * _MIB
        elif ("v6" in kind) or ("v5" in kind) or ("v4" in kind):
            vmem = 128 * _MIB
        else:
            vmem = 64 * _MIB  # unknown chip: conservative

    cores = 2 if is_v7 else 1  # v7x has 2 TensorCores per chip
    return int(vmem), int(cores)


def _dca_kernel(x_ref, t_ref, partial_ref, colid_ref, *,
                batch, block_rows, blocks_per_core):
    c = pl.program_id(0)   # TensorCore split (parallel axis)
    i = pl.program_id(1)   # batch-block index within this core (arbitrary axis)

    @pl.when(i == 0)
    def _init():
        partial_ref[...] = jnp.zeros_like(partial_ref)
        # Hoisted class-index iota: built once per core, reused every block.
        colid_ref[...] = jax.lax.broadcasted_iota(jnp.int32, colid_ref.shape, 1)

    x = x_ref[...].astype(jnp.float32)          # (TB, C), upcast in-kernel
    t = t_ref[...]                              # (TB, 1) int32
    tb, n_cls = x.shape

    # Global (unclamped) block index; rows past the true batch (ragged last
    # tile or a duplicated clamped block) are masked out of the sums.
    g = c * blocks_per_core + i
    row_ids = g * block_rows + jax.lax.broadcasted_iota(jnp.int32, (tb, 1), 0)
    valid = row_ids < batch

    # Max softmax probability per row: softmax(x)[argmax] = 1 / sum(exp(x - max)).
    row_max = jnp.max(x, axis=1, keepdims=True)
    denom = jnp.sum(jnp.exp(x - row_max), axis=1, keepdims=True)
    prob = 1.0 / denom                          # exact: per-row, cost negligible

    # First-occurrence argmax (matches torch.max tie behaviour), reusing row_max.
    col_ids = colid_ref[...]
    label = jnp.min(jnp.where(x == row_max, col_ids, n_cls), axis=1, keepdims=True)
    correct = (label == t).astype(jnp.float32)

    # Keep masking as a select (where): padded rows may hold NaN/Inf garbage.
    sum_prob = jnp.sum(jnp.where(valid, prob, 0.0))
    sum_acc = jnp.sum(jnp.where(valid, correct, 0.0))

    # Accumulate into the resident per-core output block:
    # lane 0 = running sum of max probabilities, lane 1 = running #correct.
    lane = jax.lax.broadcasted_iota(jnp.int32, (1, 128), 1)
    tile_vec = jnp.where(lane == 0, sum_prob, jnp.where(lane == 1, sum_acc, 0.0))
    partial_ref[...] += tile_vec


def dca_loss(inputs, targets, *, block_rows=None):
    """inputs: (B, C) float32/bfloat16 logits; targets: (B,) int labels -> scalar f32."""
    B, C = inputs.shape
    t2d = targets.reshape(B, 1).astype(jnp.int32)
    itemsize = jnp.dtype(inputs.dtype).itemsize

    vmem_bytes, num_cores = _chip_info()
    # Native sublane packing: f32 -> 8 rows, bf16 -> 16, int8/fp8 -> 32.
    sub = max(8, 32 // itemsize)

    if block_rows is None:
        # Whole-working-set byte budget per block (not just the logits buffers):
        #   2x logits input buffers            : 2 * C * itemsize      per row
        #   2x lane-padded (TB,128) int32 tgts : 2 * 128 * 4           per row
        #   ~4 live (TB,C) f32 temporaries +
        #   (TB,C) int32 col-id scratch        : 5 * C * 4             per row
        budget = int(vmem_bytes * 0.55)
        per_row = 2 * C * itemsize + 2 * 128 * 4 + 5 * C * 4
        block_rows = max(sub, budget // per_row)
    block_rows = int(block_rows)

    if block_rows >= B:
        block_rows = B                      # single full-dim block (always legal)
    else:
        block_rows = max(sub, (block_rows // sub) * sub)
        if block_rows >= B:
            block_rows = B

    nb = pl.cdiv(B, block_rows)             # total batch blocks
    nc = num_cores if nb >= num_cores else 1  # split only on multi-TC chips (v7x)
    nbpc = pl.cdiv(nb, nc)                  # blocks handled by each core

    def x_index(c, i):
        # Clamp so the duplicated tail block of an odd split stays in bounds;
        # the kernel masks its contribution to zero.
        return (jnp.minimum(c * nbpc + i, nb - 1), 0)

    kernel = functools.partial(
        _dca_kernel, batch=B, block_rows=block_rows, blocks_per_core=nbpc)

    cost = pl.CostEstimate(
        flops=8 * B * C,
        transcendentals=B * C,
        bytes_accessed=B * C * itemsize + B * 4 + nc * 128 * 4,
    )

    partials = pl.pallas_call(
        kernel,
        out_shape=jax.ShapeDtypeStruct((nc, 128), jnp.float32),
        grid=(nc, nbpc),
        in_specs=[
            pl.BlockSpec((block_rows, C), x_index),
            pl.BlockSpec((block_rows, 1), x_index),
        ],
        out_specs=pl.BlockSpec((1, 128), lambda c, i: (c, 0)),
        scratch_shapes=[pltpu.VMEM((block_rows, C), jnp.int32)],
        compiler_params=pltpu.CompilerParams(
            # TODO(synk): on v7x confirm with xprof that the leading "parallel"
            # axis shards across both TensorCores; if not, switch this axis to
            # pltpu.CORE_PARALLEL or drive the split with pl.core_map.
            dimension_semantics=("parallel", "arbitrary"),
            vmem_limit_bytes=int(vmem_bytes * 0.75),
        ),
        cost_estimate=cost,
    )(inputs, t2d)

    sum_prob = jnp.sum(partials[:, 0])
    sum_acc = jnp.sum(partials[:, 1])
    return jnp.abs(sum_prob - sum_acc) / B


def _dca_ref(inputs, targets):
    x = inputs.astype(jnp.float32)
    p = jax.nn.softmax(x, axis=1)
    prob = jnp.max(p, axis=1)
    label = jnp.argmax(x, axis=1)
    acc = (label == targets).astype(jnp.float32)
    B = x.shape[0]
    return jnp.abs(jnp.mean(prob) - jnp.sum(acc) / B)


if __name__ == "__main__":
    key = jax.random.PRNGKey(0)
    k1, k2, k3, k4, k5, k6 = jax.random.split(key, 6)

    # Case 1: auto block sizing, single full block.
    B, C = 8, 32
    x1 = jax.random.normal(k1, (B, C), dtype=jnp.float32)
    t1 = jax.random.randint(k2, (B,), 0, C, dtype=jnp.int32)
    out1 = jax.block_until_ready(dca_loss(x1, t1))
    ref1 = _dca_ref(x1, t1)
    assert jnp.allclose(out1, ref1, atol=1e-4), (out1, ref1)

    # Case 2: multi-block grid with ragged last tile (f32).
    B, C = 20, 48
    x2 = jax.random.normal(k3, (B, C), dtype=jnp.float32)
    t2 = jax.random.randint(k4, (B,), 0, C, dtype=jnp.int32)
    out2 = jax.block_until_ready(dca_loss(x2, t2, block_rows=8))
    ref2 = _dca_ref(x2, t2)
    assert jnp.allclose(out2, ref2, atol=1e-4), (out2, ref2)

    # Case 3: bf16 logits streamed directly into the kernel, multi-block,
    # block rows on the native bf16 packed-sublane multiple (16).
    B, C = 48, 32
    x3 = jax.random.normal(k5, (B, C), dtype=jnp.float32).astype(jnp.bfloat16)
    t3 = jax.random.randint(k6, (B,), 0, C, dtype=jnp.int32)
    out3 = jax.block_until_ready(dca_loss(x3, t3, block_rows=16))
    ref3 = _dca_ref(x3, t3)
    assert jnp.allclose(out3, ref3, atol=1e-3), (out3, ref3)

    print("KERNEL_OK")
</pallas_src>

<mosaic_0001>
module attributes {stable_mosaic.version = 11 : i64} {
  func.func @_dca_kernel(%arg0: i32, %arg1: i32, %arg2: memref<8x32xf32, #tpu.memory_space<vmem>>, %arg3: memref<8x1xi32, #tpu.memory_space<vmem>>, %arg4: memref<1x128xf32, #tpu.memory_space<vmem>>, %arg5: memref<8x32xi32, #tpu.memory_space<vmem>>) attributes {dimension_semantics = [#tpu.dimension_semantics<parallel>, #tpu.dimension_semantics<arbitrary>], iteration_bounds = array<i64: 1, 1>, scalar_prefetch = 0 : i64, scratch_operands = 1 : i64, tpu.core_type = #tpu.core_type<tc>, window_params = [{transform_indices = @transform_0, window_bounds = array<i64: 8, 32>}, {transform_indices = @transform_1, window_bounds = array<i64: 8, 1>}, {transform_indices = @transform_2, window_bounds = array<i64: 1, 128>}]} {
    %c0_i32 = arith.constant 0 : i32
    %0 = arith.cmpi eq, %arg1, %c0_i32 : i32
    %1 = arith.extui %0 : i1 to i32
    %c0_i32_0 = arith.constant 0 : i32
    %2 = arith.cmpi ne, %1, %c0_i32_0 : i32
    scf.if %2 {
      %cst_21 = arith.constant 0.000000e+00 : f32
      %57 = vector.broadcast %cst_21 : f32 to vector<1x128xf32>
      %c0_22 = arith.constant 0 : index
      %c0_23 = arith.constant 0 : index
      %58 = vector.load %arg4[%c0_22, %c0_23] : memref<1x128xf32, #tpu.memory_space<vmem>>, vector<1x128xf32>
      tpu.vector_store %arg4[%c0_22, %c0_23], %57 {strides = array<i32>} : memref<1x128xf32, #tpu.memory_space<vmem>>, vector<1x128xf32>,
      %59 = tpu.iota {dimensions = array<i32: 1>} : vector<8x32xi32>
      %c0_24 = arith.constant 0 : index
      %c0_25 = arith.constant 0 : index
      %60 = vector.load %arg5[%c0_24, %c0_25] : memref<8x32xi32, #tpu.memory_space<vmem>>, vector<8x32xi32>
      tpu.vector_store %arg5[%c0_24, %c0_25], %59 {strides = array<i32>} : memref<8x32xi32, #tpu.memory_space<vmem>>, vector<8x32xi32>,
    } else {
    }
    %c0 = arith.constant 0 : index
    %c0_1 = arith.constant 0 : index
    %3 = vector.load %arg2[%c0, %c0_1] : memref<8x32xf32, #tpu.memory_space<vmem>>, vector<8x32xf32>
    %c0_2 = arith.constant 0 : index
    %c0_3 = arith.constant 0 : index
    %4 = vector.load %arg3[%c0_2, %c0_3] : memref<8x1xi32, #tpu.memory_space<vmem>>, vector<8x1xi32>
    %c1_i32 = arith.constant 1 : i32
    %5 = arith.muli %arg0, %c1_i32 : i32
    %6 = arith.addi %5, %arg1 : i32
    %c8_i32 = arith.constant 8 : i32
    %7 = arith.muli %6, %c8_i32 : i32
    %8 = tpu.iota {dimensions = array<i32: 0>} : vector<8x1xi32>
    %9 = vector.broadcast %7 : i32 to vector<8x1xi32>
    %10 = arith.addi %9, %8 : vector<8x1xi32>
    %c8_i32_4 = arith.constant 8 : i32
    %11 = vector.broadcast %c8_i32_4 : i32 to vector<8x1xi32>
    %12 = arith.cmpi slt, %10, %11 : vector<8x1xi32>
    %cst = arith.constant dense<0xFF800000> : vector<8xf32>
    %13 = vector.multi_reduction <maximumf>, %3, %cst [1] : vector<8x32xf32> to vector<8xf32>
    %14 = vector.shape_cast %13 : vector<8xf32> to vector<8x1xf32>
    %15 = vector.broadcast %14 : vector<8x1xf32> to vector<8x32xf32>
    %16 = arith.subf %3, %15 : vector<8x32xf32>
    %17 = math.exp %16 : vector<8x32xf32>
    %cst_5 = arith.constant dense<0.000000e+00> : vector<8xf32>
    %18 = vector.multi_reduction <add>, %17, %cst_5 [1] : vector<8x32xf32> to vector<8xf32>
    %19 = vector.shape_cast %18 : vector<8xf32> to vector<8x1xf32>
    %cst_6 = arith.constant 1.000000e+00 : f32
    %20 = vector.broadcast %cst_6 : f32 to vector<8x1xf32>
    %21 = arith.divf %20, %19 : vector<8x1xf32>
    %c0_7 = arith.constant 0 : index
    %c0_8 = arith.constant 0 : index
    %22 = vector.load %arg5[%c0_7, %c0_8] : memref<8x32xi32, #tpu.memory_space<vmem>>, vector<8x32xi32>
    %23 = vector.broadcast %14 : vector<8x1xf32> to vector<8x32xf32>
    %24 = arith.cmpf oeq, %3, %23 : vector<8x32xf32>
    %c32_i32 = arith.constant 32 : i32
    %25 = vector.broadcast %c32_i32 : i32 to vector<8x32xi32>
    %26 = arith.select %24, %22, %25 : vector<8x32xi1>, vector<8x32xi32>
    %cst_9 = arith.constant dense<2147483647> : vector<8xi32>
    %27 = vector.multi_reduction <minsi>, %26, %cst_9 [1] : vector<8x32xi32> to vector<8xi32>
    %28 = vector.shape_cast %27 : vector<8xi32> to vector<8x1xi32>
    %29 = arith.cmpi eq, %28, %4 : vector<8x1xi32>
    %30 = arith.extui %29 : vector<8x1xi1> to vector<8x1xi32>
    %31 = arith.sitofp %30 : vector<8x1xi32> to vector<8x1xf32>
    %cst_10 = arith.constant 0.000000e+00 : f32
    %32 = vector.broadcast %cst_10 : f32 to vector<8x1xf32>
    %33 = arith.select %12, %21, %32 : vector<8x1xi1>, vector<8x1xf32>
    %34 = vector.shape_cast %33 : vector<8x1xf32> to vector<1x8x1xf32>
    %cst_11 = arith.constant dense<0.000000e+00> : vector<1xf32>
    %35 = vector.multi_reduction <add>, %34, %cst_11 [1, 2] : vector<1x8x1xf32> to vector<1xf32>
    %36 = vector.shape_cast %35 : vector<1xf32> to vector<1x1x1xf32>
    %37 = vector.extract %36[0, 0, 0] : f32 from vector<1x1x1xf32>
    %cst_12 = arith.constant 0.000000e+00 : f32
    %38 = vector.broadcast %cst_12 : f32 to vector<8x1xf32>
    %39 = arith.select %12, %31, %38 : vector<8x1xi1>, vector<8x1xf32>
    %40 = vector.shape_cast %39 : vector<8x1xf32> to vector<1x8x1xf32>
    %cst_13 = arith.constant dense<0.000000e+00> : vector<1xf32>
    %41 = vector.multi_reduction <add>, %40, %cst_13 [1, 2] : vector<1x8x1xf32> to vector<1xf32>
    %42 = vector.shape_cast %41 : vector<1xf32> to vector<1x1x1xf32>
    %43 = vector.extract %42[0, 0, 0] : f32 from vector<1x1x1xf32>
    %44 = tpu.iota {dimensions = array<i32: 1>} : vector<1x128xi32>
    %c0_i32_14 = arith.constant 0 : i32
    %45 = vector.broadcast %c0_i32_14 : i32 to vector<1x128xi32>
    %46 = arith.cmpi eq, %44, %45 : vector<1x128xi32>
    %c1_i32_15 = arith.constant 1 : i32
    %47 = vector.broadcast %c1_i32_15 : i32 to vector<1x128xi32>
    %48 = arith.cmpi eq, %44, %47 : vector<1x128xi32>
    %cst_16 = arith.constant 0.000000e+00 : f32
    %49 = vector.broadcast %43 : f32 to vector<1x128xf32>
    %50 = vector.broadcast %cst_16 : f32 to vector<1x128xf32>
    %51 = arith.select %48, %49, %50 : vector<1x128xi1>, vector<1x128xf32>
    %52 = vector.broadcast %37 : f32 to vector<1x128xf32>
    %53 = arith.select %46, %52, %51 : vector<1x128xi1>, vector<1x128xf32>
    %c0_17 = arith.constant 0 : index
    %c0_18 = arith.constant 0 : index
    %54 = vector.load %arg4[%c0_17, %c0_18] : memref<1x128xf32, #tpu.memory_space<vmem>>, vector<1x128xf32>
    %55 = arith.addf %54, %53 : vector<1x128xf32>
    %c0_19 = arith.constant 0 : index
    %c0_20 = arith.constant 0 : index
    %56 = vector.load %arg4[%c0_19, %c0_20] : memref<1x128xf32, #tpu.memory_space<vmem>>, vector<1x128xf32>
    tpu.vector_store %arg4[%c0_19, %c0_20], %55 {strides = array<i32>} : memref<1x128xf32, #tpu.memory_space<vmem>>, vector<1x128xf32>,
    return
  }
  func.func @transform_0(%arg0: i32, %arg1: i32) -> (i32, i32) {
    %c1_i32 = arith.constant 1 : i32
    %0 = arith.muli %arg0, %c1_i32 : i32
    %1 = arith.addi %0, %arg1 : i32
    %c0_i32 = arith.constant 0 : i32
    %2 = arith.minsi %1, %c0_i32 : i32
    %c0_i32_0 = arith.constant 0 : i32
    %c0_i32_1 = arith.constant 0 : i32
    return %2, %c0_i32_0 : i32, i32
  }
  func.func @transform_1(%arg0: i32, %arg1: i32) -> (i32, i32) {
    %c1_i32 = arith.constant 1 : i32
    %0 = arith.muli %arg0, %c1_i32 : i32
    %1 = arith.addi %0, %arg1 : i32
    %c0_i32 = arith.constant 0 : i32
    %2 = arith.minsi %1, %c0_i32 : i32
    %c0_i32_0 = arith.constant 0 : i32
    %c0_i32_1 = arith.constant 0 : i32
    return %2, %c0_i32_0 : i32, i32
  }
  func.func @transform_2(%arg0: i32, %arg1: i32) -> (i32, i32) {
    %c0_i32 = arith.constant 0 : i32
    %c0_i32_0 = arith.constant 0 : i32
    return %arg0, %c0_i32 : i32, i32
  }
}

</mosaic_0001>

<llo_original>
// kernel: tpu_custom_call.1
$region0: #{tpu_custom_call.1}
  #allocation0 [shape = 'u32[]', space=smem, size = 0x4, offset = 0x4, fixed_abs, tag = 'smem constant byte address 0x4 - core index']
  #allocation1 [shape = 'u32[144,128]{1,0:T(1,128)}', space=vmem, size = 0x12000, scoped, tag = 'internal scratch']
  #allocation2 [shape = 's32[8,32]{1,0:T(8,128)}', space=vmem, size = 0x1000, scoped, tag = 'scratch operand']
  %s0 = inlined_call_operand.vmem [shape: f32[8,32], index: 0, kind: input, shape index: {}]
  %s1 = inlined_call_operand.vmem [shape: s32[8,1], index: 1, kind: input, shape index: {}]
  %s2 = inlined_call_operand.hbm [shape: f32[1,128], index: 2, kind: output, shape index: {}]
  %s3 = sld [smem:[#allocation0]]
  $region22: #{tpu_custom_call.1} parent=0
    _
  %s5 = ssub.s32 1, %s3
  %s6 = scalar_select 0, %s5, %s3
  $region1: #{tpu_custom_call.1} parent=0
    #allocation3 [shape = 'u8[512]{0}', space=vmem, size = 0x400, scoped, tag = 'output window, operand 0, single buffered']
    #allocation4 [shape = 's32[1]{0}', space=sflag, size = 0x4, scoped, tag = 'scoped memory for tpu_custom_call.1']
    %7 = vsyncpa [#allocation4], 0
    // Predicated region
    $region2: #{tpu_custom_call.1} parent=1 // pred_check
      _
    $region3: #{tpu_custom_call.1} parent=1 // pred_check_branch
      %9 = sbr.rel (0) target = $region5
    $region4: #{tpu_custom_call.1} parent=1 // pred_region
      %s10 = sadd.s32 0, 0
      %p11 = scmp.lt.s32.totalorder %s10, 0
      %s12 = scalar_select %p11, %s10, 0
      %p13 = scmp.lt.s32.totalorder %s12, 0
      %s14 = scalar_select %p13, %s12, 0
      %s15 = smul.addr %s14, 8
      %s16 = scalar_lea.vmem %s0, %s15
      %s17 = sadd.s32 0, 0
      %p18 = scmp.lt.s32.totalorder %s17, 0
      %s19 = scalar_select %p18, %s17, 0
    $region5: #{tpu_custom_call.1} parent=1 // pred_fallthru
      _
    // Predicated region
    $region6: #{tpu_custom_call.1} parent=1 // pred_check
      _
    $region7: #{tpu_custom_call.1} parent=1 // pred_check_branch
      %21 = sbr.rel (0) target = $region9
    $region8: #{tpu_custom_call.1} parent=1 // pred_region
      %s22 = sadd.s32 0, 0
      %p23 = scmp.lt.s32.totalorder %s22, 0
      %s24 = scalar_select %p23, %s22, 0
      %p25 = scmp.lt.s32.totalorder %s24, 0
      %s26 = scalar_select %p25, %s24, 0
      %s27 = smul.addr %s26, 8
      %s28 = scalar_lea.vmem %s1, %s27
      %s29 = sadd.s32 0, 0
      %p30 = scmp.lt.s32.totalorder %s29, 0
      %s31 = scalar_select %p30, %s29, 0
    $region9: #{tpu_custom_call.1} parent=1 // pred_fallthru
      _
    %s32 = sadd.s32 0, 0
    %p33 = scmp.lt.s32.totalorder %s32, 0
    %s34 = scalar_select %p33, %s32, 0
    %p35 = scmp.lt.s32.totalorder %s34, 0
    %s36 = scalar_select %p35, %s34, 0
    %s37 = smul.addr %s36, 8
    %s38 = scalar_lea.vmem %s0, %s37
    %s39 = sadd.s32 0, 0
    %p40 = scmp.lt.s32.totalorder %s39, 0
    %s41 = scalar_select %p40, %s39, 0
    %p42 = scmp.lt.s32.totalorder %s41, 0
    %s43 = scalar_select %p42, %s41, 0
    %s44 = smul.addr %s43, 8
    %s45 = scalar_lea.vmem %s1, %s44
    %s46 = sadd.s32 0, 0
    %p47 = scmp.lt.s32.totalorder %s46, 0
    %s48 = scalar_select %p47, %s46, 0
    %p49 = scmp.lt.s32.totalorder %s48, 0
    %s50 = scalar_select %p49, %s48, 0
    %s51 = smul.addr %s50, 8
    %s52 = scalar_lea.vmem %s0, %s51
    %s53 = sadd.s32 0, 0
    %p54 = scmp.lt.s32.totalorder %s53, 0
    %s55 = scalar_select %p54, %s53, 0
    %s56 = sadd.s32 0, 0
    %p57 = scmp.lt.s32.totalorder %s56, 0
    %s58 = scalar_select %p57, %s56, 0
    %p59 = scmp.lt.s32.totalorder %s58, 0
    %s60 = scalar_select %p59, %s58, 0
    %s61 = smul.addr %s60, 8
    %s62 = scalar_lea.vmem %s1, %s61
    %s63 = sadd.s32 0, 0
    %p64 = scmp.lt.s32.totalorder %s63, 0
    %s65 = scalar_select %p64, %s63, 0
    %p66 = scmp.eq.s32.totalorder 0, 0
    // Predicated region
    $region10: #{tpu_custom_call.1} parent=1 // pred_check
      %p67 = pneg %p66
    $region11: #{tpu_custom_call.1} parent=1 // pred_check_branch
      %69 = sbr.rel (%p67) target = $region13
    $region12: #{tpu_custom_call.1} parent=1 // pred_region
      %70 = vst [vmem:[#allocation3] sm:$0x1] 0.0
      %v71 = vlaneseq
      %v72 = vand.u32 %v71, 127
      %vm73 = vcmask 261120
      %74 = vst.msk [vmem:[#allocation2] sm:$0xff] %vm73, %v72
    $region13: #{tpu_custom_call.1} parent=1 // pred_fallthru
      _
    %v75 = vld [vmem:[%s52] sm:$0xff]
    %v76 = vld [vmem:[%s62] sm:$0xff]
    %s77 = sadd.s32 0, 0
    %s78 = smul.u32 %s77, 8
    %v79 = vlaneseq
    %v80 = vshrl.u32 %v79, 7
    %v81 = vstv %s78
    %v82 = vadd.s32 %v81, %v80
    %vm83 = vcmp.lt.s32.totalorder %v82, 8
    %vm84 = vcmask 261120
    %v85 = vsel %vm84, %v75, -inf
    %86 = vmax.xlane.f32.xlu0 %v85
    %v87 = vpop.xlane.xlu0 %86
    %v88 = vsub.f32 %v75, %v87
    %v89 = vmul.f32 %v88, 1.442695
    %v90 = vpow.pop %v89
    %v91 = vsel %vm84, %v90, 0.0
    %92 = vadd.xlane.f32.xlu0 %v91
    %v93 = vpop.xlane.xlu0 %92
    %v94 = vrcp.pop %v93
    %v95 = vmul.f32 1.0, %v94
    %v96 = vld [vmem:[#allocation2] sm:$0xff]
    %vm97 = vcmp.eq.f32.partialorder %v75, %v87
    %v98 = vsel %vm97, %v96, 32
    %v99 = vsel %vm84, %v98, 2147483647
    %v100 = vand.u32 %v99, 65535
    %v101 = vshra.s32 %v99, 16
    %v102 = vcvt.s32.f32 %v100
    %v103 = vcvt.s32.f32 %v101
    %104 = vmin.xlane.f32.xlu0 %v103
    %v105 = vpop.xlane.xlu0 %104
    %vm106 = vcmp.eq.f32.partialorder %v103, %v105
    %v107 = vsel %vm106, %v102, inf
    %108 = vmin.xlane.f32.xlu0 %v107
    %v109 = vpop.xlane.xlu0 %108
    %v110 = vcvt.f32.s32 %v109
    %v111 = vcvt.f32.s32 %v105
    %v112 = vshll.u32 %v111, 16
    %v113 = vadd.s32 %v112, %v110
    %vm114 = vcmp.eq.s32.totalorder %v113, %v76
    %v115 = vsel %vm114, 1, 0
    %v116 = vcvt.s32.f32 %v115
    %v117 = vsel %vm83, %v95, 0.0
    %vm118 = vcmask 7168
    %v119 = vsel %vm118, %v117, 0.0
    %120 = vadd.xlane.f32.xlu0 %v119
    %v121 = vpop.xlane.xlu0 %120
    %v122 = vrot.slane %v121, 4
    %v123 = vadd.f32 %v121, %v122
    %v124 = vrot.slane %v123, 2
    %v125 = vadd.f32 %v123, %v124
    %v126 = vrot.slane %v125, 1
    %v127 = vadd.f32 %v125, %v126
    %s128 = vtos %v127
    %v129 = vsel %vm83, %v116, 0.0
    %v130 = vsel %vm118, %v129, 0.0
    %131 = vadd.xlane.f32.xlu0 %v130
    %v132 = vpop.xlane.xlu0 %131
    %v133 = vrot.slane %v132, 4
    %v134 = vadd.f32 %v132, %v133
    %v135 = vrot.slane %v134, 2
    %v136 = vadd.f32 %v134, %v135
    %v137 = vrot.slane %v136, 1
    %v138 = vadd.f32 %v136, %v137
    %s139 = vtos %v138
    %v140 = vlaneseq
    %v141 = vand.u32 %v140, 127
    %vm142 = vcmp.eq.s32.totalorder %v141, 0
    %vm143 = vcmp.eq.s32.totalorder %v141, 1
    %v144 = vstv %s139
    %v145 = vsel %vm143, %v144, 0.0
    %v146 = vstv %s128
    %v147 = vsel %vm142, %v146, %v145
    %v148 = vld [vmem:[#allocation3] sm:$0x1]
    %v149 = vadd.f32 %v148, %v147
    %150 = vst [vmem:[#allocation3] sm:$0x1] %v149
    // Predicated region
    $region14: #{tpu_custom_call.1} parent=1 // pred_check
      _
    $region15: #{tpu_custom_call.1} parent=1 // pred_check_branch
      %152 = sbr.rel (0) target = $region17
    $region16: #{tpu_custom_call.1} parent=1 // pred_region
      %s154 = ssub.s32 16, 16
      %155 = vsyncadd [#allocation4], %s154
      %s157 = sshll.u32 [#allocation3], 4
      %s158 = int_to_ptr.vmem [resolvable:$true] %s157
      %160 = dma.vmem_to_hbm [thread:$0]  %s158, 16, %s2, [#allocation4]
    $region17: #{tpu_custom_call.1} parent=1 // pred_fallthru
      _
    // Predicated region
    $region18: #{tpu_custom_call.1} parent=1 // pred_check
      _
    $region19: #{tpu_custom_call.1} parent=1 // pred_check_branch
      %162 = sbr.rel (0) target = $region21
    $region20: #{tpu_custom_call.1} parent=1 // pred_region
      %163 = dma.done [#allocation4], 16
    $region21: #{tpu_custom_call.1} parent=1 // pred_fallthru
      _
    %164 = vsyncpa [#allocation4], 1

</llo_original>
